<compile_context>
chip_gen: v7x
topology: tpu7x:2x2x1
jax: 0.10.0
libtpu: 0.0.40
codegen_flags: <defaults>
</compile_context>

<pallas_src>
import jax
import jax.numpy as jnp
from jax import lax
from jax.experimental import pallas as pl
from jax.experimental.pallas import tpu as pltpu

BINS = 100          # module default
BINS_PAD = 128      # lane-dense histogram accumulator (bins 100..127 are dead)
LANE = 128
NCORES = 2          # parallel grid axis (v7x: 2 TCs; harmless serial loop on v5e/v6e)
RC = 64             # rows per chunk in the min/max inner loop
MAX_TM = 1024       # max block rows (512 KB f32 per input per block)


# ---------------------------------------------------------------------------
# Kernels
# ---------------------------------------------------------------------------
def _make_minmax_kernel(tm):
    n_chunks = tm // RC

    def kernel(p_ref, t_ref, min_ref, max_ref):
        @pl.when(pl.program_id(1) == 0)
        def _():
            min_ref[...] = jnp.full_like(min_ref, jnp.inf)
            max_ref[...] = jnp.full_like(max_ref, -jnp.inf)

        def body(c, carry):
            mn, mx = carry
            r = pl.multiple_of(c * RC, RC)
            p = p_ref[pl.ds(r, RC), :]
            t = t_ref[pl.ds(r, RC), :]
            p_nan = jnp.isnan(p)          # NaN padding -> neutral element
            t_nan = jnp.isnan(t)
            mn = jnp.minimum(mn, jnp.minimum(jnp.where(p_nan, jnp.inf, p),
                                             jnp.where(t_nan, jnp.inf, t)))
            mx = jnp.maximum(mx, jnp.maximum(jnp.where(p_nan, -jnp.inf, p),
                                             jnp.where(t_nan, -jnp.inf, t)))
            return mn, mx

        init = (jnp.full((RC, LANE), jnp.inf, jnp.float32),
                jnp.full((RC, LANE), -jnp.inf, jnp.float32))
        mn, mx = lax.fori_loop(0, n_chunks, body, init)
        min_ref[...] = jnp.minimum(min_ref[...],
                                   jnp.min(mn, axis=0, keepdims=True))
        max_ref[...] = jnp.maximum(max_ref[...],
                                   jnp.max(mx, axis=0, keepdims=True))

    return kernel


def _make_hist_kernel(tm):
    def kernel(par_ref, p_ref, t_ref, hp_ref, ht_ref):
        """par_ref: SMEM f32[3] = [lo, hi, scale]."""
        @pl.when(pl.program_id(1) == 0)
        def _():
            hp_ref[...] = jnp.zeros_like(hp_ref)
            ht_ref[...] = jnp.zeros_like(ht_ref)

        lo = par_ref[0]
        hi = par_ref[1]
        scale = par_ref[2]
        # hoisted out of the loops (broadcasts are not CSE'd by JAX)
        bins_iota = lax.broadcasted_iota(jnp.int32, (1, 1, BINS_PAD), 2)

        def block_hist(x_ref):
            def body(r, acc):
                x = x_ref[pl.ds(r, 1), :]                         # (1, LANE) f32
                in_range = jnp.logical_and(x >= lo, x <= hi)      # NaN -> False
                idx = jnp.floor((x - lo) * scale).astype(jnp.int32)
                idx = jnp.clip(idx, 0, BINS - 1)                  # x == hi -> last bin
                idx = jnp.where(in_range, idx, BINS_PAD - 1)      # OOB / NaN -> dead bin
                oh = (idx[:, :, None] == bins_iota).astype(jnp.float32)  # (1,128,128)
                part = jnp.sum(oh, axis=0)                        # (LANE, BINS_PAD)
                part = jnp.sum(part, axis=0, keepdims=True)       # (1, BINS_PAD)
                return acc + part

            return lax.fori_loop(0, tm, body,
                                 jnp.zeros((1, BINS_PAD), jnp.float32))

        # per-block partial counts are <= tm*LANE < 2**24 -> exact in f32;
        # cross-block accumulation is int32 -> exact for any tensor size.
        hp_ref[...] += block_hist(p_ref).astype(jnp.int32)
        ht_ref[...] += block_hist(t_ref).astype(jnp.int32)

    return kernel


# ---------------------------------------------------------------------------
# Wrappers
# ---------------------------------------------------------------------------
def _round_up(x, m):
    return ((x + m - 1) // m) * m


def _pad_to_tiles(x_flat, rows):
    """NaN-pad a flat f32 array to rows*LANE elements; reshape to (rows, LANE)."""
    pad = rows * LANE - x_flat.shape[0]
    if pad:
        x_flat = jnp.concatenate(
            [x_flat, jnp.full((pad,), jnp.nan, x_flat.dtype)])
    return x_flat.reshape(rows, LANE)


def hist_loss(prediction, target, bins=BINS):
    assert bins == BINS, "kernel compiled for 100 bins"
    p = prediction.reshape(-1).astype(jnp.float32)
    t = target.reshape(-1).astype(jnp.float32)

    rows_raw = pl.cdiv(max(p.shape[0], t.shape[0]), LANE)
    tm = min(MAX_TM, _round_up(rows_raw, RC))          # block rows, multiple of 64
    rows = _round_up(rows_raw, NCORES * tm)
    steps = rows // (NCORES * tm)

    # single padded copy per tensor, reused by both passes
    p2d = _pad_to_tiles(p, rows)
    t2d = _pad_to_tiles(t, rows)

    in_map = lambda c, i: (c * steps + i, 0)
    out_map = lambda c, i: (0, c)
    cparams = pltpu.CompilerParams(
        dimension_semantics=("parallel", "arbitrary"))

    # ---- pass 1: fused global min / max of both tensors ---------------------
    mins, maxs = pl.pallas_call(
        _make_minmax_kernel(tm),
        out_shape=(jax.ShapeDtypeStruct((1, NCORES * LANE), jnp.float32),
                   jax.ShapeDtypeStruct((1, NCORES * LANE), jnp.float32)),
        grid=(NCORES, steps),
        in_specs=[pl.BlockSpec((tm, LANE), in_map),
                  pl.BlockSpec((tm, LANE), in_map)],
        out_specs=(pl.BlockSpec((1, LANE), out_map),
                   pl.BlockSpec((1, LANE), out_map)),
        compiler_params=cparams,
    )(p2d, t2d)
    minv = jnp.min(mins)
    maxv = jnp.max(maxs)

    lo = minv + 0.1
    hi = maxv
    # Guard: a degenerate range (maxv - minv <= 0.1) would make scale inf/neg;
    # torch.histogram errors there -- we just produce empty histograms instead.
    scale = jnp.float32(BINS) / jnp.maximum(hi - lo, jnp.float32(1e-12))
    params = jnp.stack([lo, hi, scale]).astype(jnp.float32)

    # ---- pass 2: fused 100-bin histograms of both tensors -------------------
    hp_raw, ht_raw = pl.pallas_call(
        _make_hist_kernel(tm),
        out_shape=(jax.ShapeDtypeStruct((1, NCORES * BINS_PAD), jnp.int32),
                   jax.ShapeDtypeStruct((1, NCORES * BINS_PAD), jnp.int32)),
        grid=(NCORES, steps),
        in_specs=[pl.BlockSpec(memory_space=pltpu.MemorySpace.SMEM),
                  pl.BlockSpec((tm, LANE), in_map),
                  pl.BlockSpec((tm, LANE), in_map)],
        out_specs=(pl.BlockSpec((1, BINS_PAD), out_map),
                   pl.BlockSpec((1, BINS_PAD), out_map)),
        compiler_params=cparams,
    )(params, p2d, t2d)

    hist_p = jnp.sum(hp_raw.reshape(NCORES, BINS_PAD),
                     axis=0)[:BINS].astype(jnp.float32)
    hist_t = jnp.sum(ht_raw.reshape(NCORES, BINS_PAD),
                     axis=0)[:BINS].astype(jnp.float32)

    # nn.L1Loss(): mean absolute difference over the 100 bins (tiny; JAX glue)
    loss = jnp.mean(jnp.abs(hist_p - hist_t))
    return loss, (hist_p, hist_t, lo, hi)


# Pure-JAX reference of the same bin-assignment formula (correctness check).
def _ref_hist(x_flat, lo, hi):
    x = x_flat.astype(jnp.float32)
    scale = jnp.float32(BINS) / jnp.maximum(hi - lo, jnp.float32(1e-12))
    idx = jnp.clip(jnp.floor((x - lo) * scale).astype(jnp.int32), 0, BINS - 1)
    mask = jnp.logical_and(x >= lo, x <= hi)
    onehot = jnp.logical_and(idx[:, None] == jnp.arange(BINS)[None, :],
                             mask[:, None])
    return jnp.sum(onehot.astype(jnp.float32), axis=0)


if __name__ == "__main__":
    key = jax.random.PRNGKey(0)
    kp, kt = jax.random.split(key)
    # NCHW like the PyTorch module's typical input
    pred = jax.random.normal(kp, (2, 4, 16, 16), dtype=jnp.float32)
    targ = 0.5 * jax.random.normal(kt, (2, 4, 16, 16), dtype=jnp.float32) + 0.1

    loss, (hp, ht, lo, hi) = jax.jit(hist_loss)(pred, targ)
    loss = jax.block_until_ready(loss)

    # Correctness checks against a pure-JAX reference of the same semantics.
    minv_ref = jnp.minimum(pred.min(), targ.min())
    maxv_ref = jnp.maximum(pred.max(), targ.max())
    assert jnp.allclose(lo, minv_ref + 0.1), "min mismatch"
    assert jnp.allclose(hi, maxv_ref), "max mismatch"

    hp_ref = _ref_hist(pred.reshape(-1), lo, hi)
    ht_ref = _ref_hist(targ.reshape(-1), lo, hi)
    loss_ref = jnp.mean(jnp.abs(hp_ref - ht_ref))
    assert jnp.allclose(hp, hp_ref), "prediction histogram mismatch"
    assert jnp.allclose(ht, ht_ref), "target histogram mismatch"
    assert jnp.allclose(loss, loss_ref, atol=1e-5), "loss mismatch"
    assert float(hp.sum()) + float(ht.sum()) > 0, "empty histograms"

    print("KERNEL_OK")
</pallas_src>

<mosaic_0001>
module attributes {stable_mosaic.version = 11 : i64} {
  func.func @kernel(%arg0: i32, %arg1: i32, %arg2: memref<64x128xf32, #tpu.memory_space<vmem>>, %arg3: memref<64x128xf32, #tpu.memory_space<vmem>>, %arg4: memref<1x128xf32, #tpu.memory_space<vmem>>, %arg5: memref<1x128xf32, #tpu.memory_space<vmem>>) attributes {dimension_semantics = [#tpu.dimension_semantics<parallel>, #tpu.dimension_semantics<arbitrary>], iteration_bounds = array<i64: 2, 1>, scalar_prefetch = 0 : i64, scratch_operands = 0 : i64, tpu.core_type = #tpu.core_type<tc>, window_params = [{transform_indices = @transform_0, window_bounds = array<i64: 64, 128>}, {transform_indices = @transform_1, window_bounds = array<i64: 64, 128>}, {transform_indices = @transform_2, window_bounds = array<i64: 1, 128>}, {transform_indices = @transform_3, window_bounds = array<i64: 1, 128>}]} {
    %c0_i32 = arith.constant 0 : i32
    %0 = arith.cmpi eq, %arg1, %c0_i32 : i32
    %1 = arith.extui %0 : i1 to i32
    %c0_i32_0 = arith.constant 0 : i32
    %2 = arith.cmpi ne, %1, %c0_i32_0 : i32
    scf.if %2 {
      %cst_18 = arith.constant 0x7F800000 : f32
      %35 = vector.broadcast %cst_18 : f32 to vector<1x128xf32>
      %c0_19 = arith.constant 0 : index
      %c0_20 = arith.constant 0 : index
      %36 = vector.load %arg4[%c0_19, %c0_20] : memref<1x128xf32, #tpu.memory_space<vmem>>, vector<1x128xf32>
      tpu.vector_store %arg4[%c0_19, %c0_20], %35 {strides = array<i32>} : memref<1x128xf32, #tpu.memory_space<vmem>>, vector<1x128xf32>,
      %cst_21 = arith.constant 0xFF800000 : f32
      %37 = vector.broadcast %cst_21 : f32 to vector<1x128xf32>
      %c0_22 = arith.constant 0 : index
      %c0_23 = arith.constant 0 : index
      %38 = vector.load %arg5[%c0_22, %c0_23] : memref<1x128xf32, #tpu.memory_space<vmem>>, vector<1x128xf32>
      tpu.vector_store %arg5[%c0_22, %c0_23], %37 {strides = array<i32>} : memref<1x128xf32, #tpu.memory_space<vmem>>, vector<1x128xf32>,
    } else {
    }
    %cst = arith.constant 0x7F800000 : f32
    %3 = vector.broadcast %cst : f32 to vector<64x128xf32>
    %cst_1 = arith.constant 0xFF800000 : f32
    %4 = vector.broadcast %cst_1 : f32 to vector<64x128xf32>
    %c0_i32_2 = arith.constant 0 : i32
    %c64_i32 = arith.constant 64 : i32
    %5 = arith.muli %c0_i32_2, %c64_i32 : i32
    %6 = tpu.assume_multiple %5, 64 : i32
    %7 = arith.index_cast %6 : i32 to index
    %c0 = arith.constant 0 : index
    %8 = vector.load %arg2[%7, %c0] : memref<64x128xf32, #tpu.memory_space<vmem>>, vector<64x128xf32>
    %9 = arith.index_cast %6 : i32 to index
    %c0_3 = arith.constant 0 : index
    %10 = vector.load %arg3[%9, %c0_3] : memref<64x128xf32, #tpu.memory_space<vmem>>, vector<64x128xf32>
    %11 = arith.cmpf one, %8, %8 : vector<64x128xf32>
    %12 = arith.cmpf one, %10, %10 : vector<64x128xf32>
    %cst_4 = arith.constant 0x7F800000 : f32
    %13 = vector.broadcast %cst_4 : f32 to vector<64x128xf32>
    %14 = arith.select %11, %13, %8 : vector<64x128xi1>, vector<64x128xf32>
    %cst_5 = arith.constant 0x7F800000 : f32
    %15 = vector.broadcast %cst_5 : f32 to vector<64x128xf32>
    %16 = arith.select %12, %15, %10 : vector<64x128xi1>, vector<64x128xf32>
    %17 = arith.minimumf %14, %16 : vector<64x128xf32>
    %18 = arith.minimumf %3, %17 : vector<64x128xf32>
    %cst_6 = arith.constant 0xFF800000 : f32
    %19 = vector.broadcast %cst_6 : f32 to vector<64x128xf32>
    %20 = arith.select %11, %19, %8 : vector<64x128xi1>, vector<64x128xf32>
    %cst_7 = arith.constant 0xFF800000 : f32
    %21 = vector.broadcast %cst_7 : f32 to vector<64x128xf32>
    %22 = arith.select %12, %21, %10 : vector<64x128xi1>, vector<64x128xf32>
    %23 = arith.maximumf %20, %22 : vector<64x128xf32>
    %24 = arith.maximumf %4, %23 : vector<64x128xf32>
    %c1_i32 = arith.constant 1 : i32
    %c0_8 = arith.constant 0 : index
    %c0_9 = arith.constant 0 : index
    %25 = vector.load %arg4[%c0_8, %c0_9] : memref<1x128xf32, #tpu.memory_space<vmem>>, vector<1x128xf32>
    %cst_10 = arith.constant dense<0x7F800000> : vector<128xf32>
    %26 = vector.multi_reduction <minimumf>, %18, %cst_10 [0] : vector<64x128xf32> to vector<128xf32>
    %27 = vector.shape_cast %26 : vector<128xf32> to vector<1x128xf32>
    %28 = arith.minimumf %25, %27 : vector<1x128xf32>
    %c0_11 = arith.constant 0 : index
    %c0_12 = arith.constant 0 : index
    %29 = vector.load %arg4[%c0_11, %c0_12] : memref<1x128xf32, #tpu.memory_space<vmem>>, vector<1x128xf32>
    tpu.vector_store %arg4[%c0_11, %c0_12], %28 {strides = array<i32>} : memref<1x128xf32, #tpu.memory_space<vmem>>, vector<1x128xf32>,
    %c0_13 = arith.constant 0 : index
    %c0_14 = arith.constant 0 : index
    %30 = vector.load %arg5[%c0_13, %c0_14] : memref<1x128xf32, #tpu.memory_space<vmem>>, vector<1x128xf32>
    %cst_15 = arith.constant dense<0xFF800000> : vector<128xf32>
    %31 = vector.multi_reduction <maximumf>, %24, %cst_15 [0] : vector<64x128xf32> to vector<128xf32>
    %32 = vector.shape_cast %31 : vector<128xf32> to vector<1x128xf32>
    %33 = arith.maximumf %30, %32 : vector<1x128xf32>
    %c0_16 = arith.constant 0 : index
    %c0_17 = arith.constant 0 : index
    %34 = vector.load %arg5[%c0_16, %c0_17] : memref<1x128xf32, #tpu.memory_space<vmem>>, vector<1x128xf32>
    tpu.vector_store %arg5[%c0_16, %c0_17], %33 {strides = array<i32>} : memref<1x128xf32, #tpu.memory_space<vmem>>, vector<1x128xf32>,
    return
  }
  func.func @transform_0(%arg0: i32, %arg1: i32) -> (i32, i32) {
    %c1_i32 = arith.constant 1 : i32
    %0 = arith.muli %arg0, %c1_i32 : i32
    %1 = arith.addi %0, %arg1 : i32
    %c0_i32 = arith.constant 0 : i32
    %c0_i32_0 = arith.constant 0 : i32
    return %1, %c0_i32 : i32, i32
  }
  func.func @transform_1(%arg0: i32, %arg1: i32) -> (i32, i32) {
    %c1_i32 = arith.constant 1 : i32
    %0 = arith.muli %arg0, %c1_i32 : i32
    %1 = arith.addi %0, %arg1 : i32
    %c0_i32 = arith.constant 0 : i32
    %c0_i32_0 = arith.constant 0 : i32
    return %1, %c0_i32 : i32, i32
  }
  func.func @transform_2(%arg0: i32, %arg1: i32) -> (i32, i32) {
    %c0_i32 = arith.constant 0 : i32
    %c0_i32_0 = arith.constant 0 : i32
    return %c0_i32, %arg0 : i32, i32
  }
  func.func @transform_3(%arg0: i32, %arg1: i32) -> (i32, i32) {
    %c0_i32 = arith.constant 0 : i32
    %c0_i32_0 = arith.constant 0 : i32
    return %c0_i32, %arg0 : i32, i32
  }
}

module attributes {stable_mosaic.version = 11 : i64} {
  func.func @kernel(%arg0: i32, %arg1: i32, %arg2: memref<3xf32, #tpu.memory_space<smem>>, %arg3: memref<64x128xf32, #tpu.memory_space<vmem>>, %arg4: memref<64x128xf32, #tpu.memory_space<vmem>>, %arg5: memref<1x128xi32, #tpu.memory_space<vmem>>, %arg6: memref<1x128xi32, #tpu.memory_space<vmem>>) attributes {dimension_semantics = [#tpu.dimension_semantics<parallel>, #tpu.dimension_semantics<arbitrary>], iteration_bounds = array<i64: 2, 1>, scalar_prefetch = 0 : i64, scratch_operands = 0 : i64, tpu.core_type = #tpu.core_type<tc>, window_params = [{transform_indices = @transform_0, window_bounds = array<i64: 3>}, {transform_indices = @transform_1, window_bounds = array<i64: 64, 128>}, {transform_indices = @transform_2, window_bounds = array<i64: 64, 128>}, {transform_indices = @transform_3, window_bounds = array<i64: 1, 128>}, {transform_indices = @transform_4, window_bounds = array<i64: 1, 128>}]} {
    %c0_i32 = arith.constant 0 : i32
    %0 = arith.cmpi eq, %arg1, %c0_i32 : i32
    %1 = arith.extui %0 : i1 to i32
    %c0_i32_0 = arith.constant 0 : i32
    %2 = arith.cmpi ne, %1, %c0_i32_0 : i32
    scf.if %2 {
      %c0_i32_16 = arith.constant 0 : i32
      %21 = vector.broadcast %c0_i32_16 : i32 to vector<1x128xi32>
      %c0_17 = arith.constant 0 : index
      %c0_18 = arith.constant 0 : index
      %22 = vector.load %arg5[%c0_17, %c0_18] : memref<1x128xi32, #tpu.memory_space<vmem>>, vector<1x128xi32>
      tpu.vector_store %arg5[%c0_17, %c0_18], %21 {strides = array<i32>} : memref<1x128xi32, #tpu.memory_space<vmem>>, vector<1x128xi32>,
      %c0_i32_19 = arith.constant 0 : i32
      %23 = vector.broadcast %c0_i32_19 : i32 to vector<1x128xi32>
      %c0_20 = arith.constant 0 : index
      %c0_21 = arith.constant 0 : index
      %24 = vector.load %arg6[%c0_20, %c0_21] : memref<1x128xi32, #tpu.memory_space<vmem>>, vector<1x128xi32>
      tpu.vector_store %arg6[%c0_20, %c0_21], %23 {strides = array<i32>} : memref<1x128xi32, #tpu.memory_space<vmem>>, vector<1x128xi32>,
    } else {
    }
    %c0 = arith.constant 0 : index
    %3 = memref.load %arg2[%c0] : memref<3xf32, #tpu.memory_space<smem>>
    %c1 = arith.constant 1 : index
    %4 = memref.load %arg2[%c1] : memref<3xf32, #tpu.memory_space<smem>>
    %c2 = arith.constant 2 : index
    %5 = memref.load %arg2[%c2] : memref<3xf32, #tpu.memory_space<smem>>
    %6 = tpu.iota {dimensions = array<i32: 2>} : vector<1x1x128xi32>
    %c0_1 = arith.constant 0 : index
    %c0_2 = arith.constant 0 : index
    %7 = vector.load %arg5[%c0_1, %c0_2] : memref<1x128xi32, #tpu.memory_space<vmem>>, vector<1x128xi32>
    %cst = arith.constant 0.000000e+00 : f32
    %8 = vector.broadcast %cst : f32 to vector<1x128xf32>
    %c0_i32_3 = arith.constant 0 : i32
    %c64_i32 = arith.constant 64 : i32
    %9 = arith.addi %c0_i32_3, %c64_i32 : i32
    %c1_i32 = arith.constant 1 : i32
    %10 = scf.for %arg7 = %c0_i32_3 to %9 step %c1_i32 iter_args(%arg8 = %8) -> (vector<1x128xf32>)  : i32 {
      %21 = arith.index_cast %arg7 : i32 to index
      %c0_16 = arith.constant 0 : index
      %22 = vector.load %arg3[%21, %c0_16] : memref<64x128xf32, #tpu.memory_space<vmem>>, vector<1x128xf32>
      %23 = vector.broadcast %3 : f32 to vector<1x128xf32>
      %24 = arith.cmpf oge, %22, %23 : vector<1x128xf32>
      %25 = vector.broadcast %4 : f32 to vector<1x128xf32>
      %26 = arith.cmpf ole, %22, %25 : vector<1x128xf32>
      %27 = arith.andi %24, %26 : vector<1x128xi1>
      %28 = vector.broadcast %3 : f32 to vector<1x128xf32>
      %29 = arith.subf %22, %28 : vector<1x128xf32>
      %30 = vector.broadcast %5 : f32 to vector<1x128xf32>
      %31 = arith.mulf %29, %30 : vector<1x128xf32>
      %32 = math.floor %31 : vector<1x128xf32>
      %33 = arith.fptosi %32 : vector<1x128xf32> to vector<1x128xi32>
      %c0_i32_17 = arith.constant 0 : i32
      %c99_i32 = arith.constant 99 : i32
      %34 = vector.broadcast %c0_i32_17 : i32 to vector<1x128xi32>
      %35 = arith.maxsi %34, %33 : vector<1x128xi32>
      %36 = vector.broadcast %c99_i32 : i32 to vector<1x128xi32>
      %37 = arith.minsi %36, %35 : vector<1x128xi32>
      %c127_i32 = arith.constant 127 : i32
      %38 = vector.broadcast %c127_i32 : i32 to vector<1x128xi32>
      %39 = arith.select %27, %37, %38 : vector<1x128xi1>, vector<1x128xi32>
      %40 = vector.shape_cast %39 : vector<1x128xi32> to vector<1x128x1xi32>
      %41 = vector.broadcast %40 : vector<1x128x1xi32> to vector<1x128x128xi32>
      %42 = vector.broadcast %6 : vector<1x1x128xi32> to vector<1x128x128xi32>
      %43 = arith.cmpi eq, %41, %42 : vector<1x128x128xi32>
      %44 = arith.extui %43 : vector<1x128x128xi1> to vector<1x128x128xi32>
      %45 = arith.sitofp %44 : vector<1x128x128xi32> to vector<1x128x128xf32>
      %cst_18 = arith.constant dense<0.000000e+00> : vector<128x128xf32>
      %46 = vector.multi_reduction <add>, %45, %cst_18 [0] : vector<1x128x128xf32> to vector<128x128xf32>
      %cst_19 = arith.constant dense<0.000000e+00> : vector<128xf32>
      %47 = vector.multi_reduction <add>, %46, %cst_19 [0] : vector<128x128xf32> to vector<128xf32>
      %48 = vector.shape_cast %47 : vector<128xf32> to vector<1x128xf32>
      %49 = arith.addf %arg8, %48 : vector<1x128xf32>
      scf.yield %49 : vector<1x128xf32>
    }
    %c64_i32_4 = arith.constant 64 : i32
    %11 = arith.fptosi %10 : vector<1x128xf32> to vector<1x128xi32>
    %12 = arith.addi %7, %11 : vector<1x128xi32>
    %c0_5 = arith.constant 0 : index
    %c0_6 = arith.constant 0 : index
    %13 = vector.load %arg5[%c0_5, %c0_6] : memref<1x128xi32, #tpu.memory_space<vmem>>, vector<1x128xi32>
    tpu.vector_store %arg5[%c0_5, %c0_6], %12 {strides = array<i32>} : memref<1x128xi32, #tpu.memory_space<vmem>>, vector<1x128xi32>,
    %c0_7 = arith.constant 0 : index
    %c0_8 = arith.constant 0 : index
    %14 = vector.load %arg6[%c0_7, %c0_8] : memref<1x128xi32, #tpu.memory_space<vmem>>, vector<1x128xi32>
    %cst_9 = arith.constant 0.000000e+00 : f32
    %15 = vector.broadcast %cst_9 : f32 to vector<1x128xf32>
    %c0_i32_10 = arith.constant 0 : i32
    %c64_i32_11 = arith.constant 64 : i32
    %16 = arith.addi %c0_i32_10, %c64_i32_11 : i32
    %c1_i32_12 = arith.constant 1 : i32
    %17 = scf.for %arg7 = %c0_i32_10 to %16 step %c1_i32_12 iter_args(%arg8 = %15) -> (vector<1x128xf32>)  : i32 {
      %21 = arith.index_cast %arg7 : i32 to index
      %c0_16 = arith.constant 0 : index
      %22 = vector.load %arg4[%21, %c0_16] : memref<64x128xf32, #tpu.memory_space<vmem>>, vector<1x128xf32>
      %23 = vector.broadcast %3 : f32 to vector<1x128xf32>
      %24 = arith.cmpf oge, %22, %23 : vector<1x128xf32>
      %25 = vector.broadcast %4 : f32 to vector<1x128xf32>
      %26 = arith.cmpf ole, %22, %25 : vector<1x128xf32>
      %27 = arith.andi %24, %26 : vector<1x128xi1>
      %28 = vector.broadcast %3 : f32 to vector<1x128xf32>
      %29 = arith.subf %22, %28 : vector<1x128xf32>
      %30 = vector.broadcast %5 : f32 to vector<1x128xf32>
      %31 = arith.mulf %29, %30 : vector<1x128xf32>
      %32 = math.floor %31 : vector<1x128xf32>
      %33 = arith.fptosi %32 : vector<1x128xf32> to vector<1x128xi32>
      %c0_i32_17 = arith.constant 0 : i32
      %c99_i32 = arith.constant 99 : i32
      %34 = vector.broadcast %c0_i32_17 : i32 to vector<1x128xi32>
      %35 = arith.maxsi %34, %33 : vector<1x128xi32>
      %36 = vector.broadcast %c99_i32 : i32 to vector<1x128xi32>
      %37 = arith.minsi %36, %35 : vector<1x128xi32>
      %c127_i32 = arith.constant 127 : i32
      %38 = vector.broadcast %c127_i32 : i32 to vector<1x128xi32>
      %39 = arith.select %27, %37, %38 : vector<1x128xi1>, vector<1x128xi32>
      %40 = vector.shape_cast %39 : vector<1x128xi32> to vector<1x128x1xi32>
      %41 = vector.broadcast %40 : vector<1x128x1xi32> to vector<1x128x128xi32>
      %42 = vector.broadcast %6 : vector<1x1x128xi32> to vector<1x128x128xi32>
      %43 = arith.cmpi eq, %41, %42 : vector<1x128x128xi32>
      %44 = arith.extui %43 : vector<1x128x128xi1> to vector<1x128x128xi32>
      %45 = arith.sitofp %44 : vector<1x128x128xi32> to vector<1x128x128xf32>
      %cst_18 = arith.constant dense<0.000000e+00> : vector<128x128xf32>
      %46 = vector.multi_reduction <add>, %45, %cst_18 [0] : vector<1x128x128xf32> to vector<128x128xf32>
      %cst_19 = arith.constant dense<0.000000e+00> : vector<128xf32>
      %47 = vector.multi_reduction <add>, %46, %cst_19 [0] : vector<128x128xf32> to vector<128xf32>
      %48 = vector.shape_cast %47 : vector<128xf32> to vector<1x128xf32>
      %49 = arith.addf %arg8, %48 : vector<1x128xf32>
      scf.yield %49 : vector<1x128xf32>
    }
    %c64_i32_13 = arith.constant 64 : i32
    %18 = arith.fptosi %17 : vector<1x128xf32> to vector<1x128xi32>
    %19 = arith.addi %14, %18 : vector<1x128xi32>
    %c0_14 = arith.constant 0 : index
    %c0_15 = arith.constant 0 : index
    %20 = vector.load %arg6[%c0_14, %c0_15] : memref<1x128xi32, #tpu.memory_space<vmem>>, vector<1x128xi32>
    tpu.vector_store %arg6[%c0_14, %c0_15], %19 {strides = array<i32>} : memref<1x128xi32, #tpu.memory_space<vmem>>, vector<1x128xi32>,
    return
  }
  func.func @transform_0(%arg0: i32, %arg1: i32) -> i32 {
    %c0_i32 = arith.constant 0 : i32
    %c0_i32_0 = arith.constant 0 : i32
    return %c0_i32 : i32
  }
  func.func @transform_1(%arg0: i32, %arg1: i32) -> (i32, i32) {
    %c1_i32 = arith.constant 1 : i32
    %0 = arith.muli %arg0, %c1_i32 : i32
    %1 = arith.addi %0, %arg1 : i32
    %c0_i32 = arith.constant 0 : i32
    %c0_i32_0 = arith.constant 0 : i32
    return %1, %c0_i32 : i32, i32
  }
  func.func @transform_2(%arg0: i32, %arg1: i32) -> (i32, i32) {
    %c1_i32 = arith.constant 1 : i32
    %0 = arith.muli %arg0, %c1_i32 : i32
    %1 = arith.addi %0, %arg1 : i32
    %c0_i32 = arith.constant 0 : i32
    %c0_i32_0 = arith.constant 0 : i32
    return %1, %c0_i32 : i32, i32
  }
  func.func @transform_3(%arg0: i32, %arg1: i32) -> (i32, i32) {
    %c0_i32 = arith.constant 0 : i32
    %c0_i32_0 = arith.constant 0 : i32
    return %c0_i32, %arg0 : i32, i32
  }
  func.func @transform_4(%arg0: i32, %arg1: i32) -> (i32, i32) {
    %c0_i32 = arith.constant 0 : i32
    %c0_i32_0 = arith.constant 0 : i32
    return %c0_i32, %arg0 : i32, i32
  }
}

</mosaic_0001>

<llo_original>
// kernel: hist_loss.2
$region0: #{hist_loss.2}
  #allocation0 [shape = 'u32[]', space=smem, size = 0x4, offset = 0x4, fixed_abs, tag = 'smem constant byte address 0x4 - core index']
  #allocation1 [shape = 'u32[144,128]{1,0:T(1,128)}', space=vmem, size = 0x12000, scoped, tag = 'internal scratch']
  %s0 = inlined_call_operand.vmem [shape: f32[128,128], index: 0, kind: input, shape index: {}]
  %s1 = inlined_call_operand.vmem [shape: f32[128,128], index: 1, kind: input, shape index: {}]
  %s2 = inlined_call_operand.vmem [shape: f32[1,256], index: 2, kind: output, shape index: {0}]
  %s3 = inlined_call_operand.vmem [shape: f32[1,256], index: 3, kind: output, shape index: {1}]
  %4 = xla_tuple %s2, %s3
  %s5 = sld [smem:[#allocation0]]
  $region53: #{hist_loss.2} parent=0
    _
  %s7 = ssub.s32 1, %s5
  %s8 = scalar_select 0, %s7, %s5
  loop: start=0, step=1, limit=4
  $region2: #{hist_loss.2} parent=0 // loop_pre_header
    _
  $region3: #{hist_loss.2} parent=0 // loop_header
    %s10 = sphi 0, %s14
    %p11 = scmp.ge.s32.totalorder %s10, 4
    %s17 = sphi 0, %s29
    %s18 = sphi 0, %s25
    %s19 = sphi 0, %s17
    %s20 = sphi 0, %s18
    %s21 = sphi 0, %s19
    %s22 = sphi 0, %s20
    %s34 = sphi 0, %s36
    %s37 = sphi 0, %s34
    %s38 = sphi 0, %s37
    %s54 = sphi 0, %s38
    %s62 = sphi 0, %s64
    %s65 = sphi 0, %s62
    %s66 = sphi 0, %s65
    %s82 = sphi 0, %s66
    %s88 = sphi 0, %s90
    %s91 = sphi 0, %s88
    %s92 = sphi 0, %s91
    %s108 = sphi 0, %s92
    %s114 = sphi 0, %s116
    %s117 = sphi 0, %s114
    %s118 = sphi 0, %s117
    %s134 = sphi 0, %s118
  $region4: #{hist_loss.2} parent=0 // loop_header_branch
    %13 = sbr.rel (%p11) target = $region8
  $region5: #{hist_loss.2} parent=0 // loop_body
    %s15 = ssub.s32 %s10, 1
    %s16 = ssub.s32 %s10, 2
    %s23 = sadd.s32 1, %s18
    %p24 = scmp.ge.s32.totalorder %s23, 1
    %s25 = scalar_select %p24, 0, %s23
    %s26 = sadd.s32 1, %s17
    %s27 = scalar_select %p24, %s26, %s17
    %p28 = scmp.ge.s32.totalorder %s27, 2
    %s29 = scalar_select %p28, 0, %s27
    %s30 = sadd.s32 %s17, %s18
    %s31 = sadd.s32 %s29, %s25
    %s32 = ssub.s32 %s30, %s31
    %p33 = scmp.eq.s32.totalorder %s32, 0
    %s35 = sadd.s32 %s34, 1
    %s36 = scalar_select %p33, %s34, %s35
    %p39 = pneg %p33
    %p40 = scmp.eq.s32.totalorder %s10, 1
    %p41 = por %p39, %p40
    %p42 = scmp.ne.s32.totalorder %s34, %s37
    %p43 = scmp.eq.s32.totalorder %s10, 0
    %p44 = por %p42, %p43
    %p45 = scmp.ne.s32.totalorder %s34, %s37
    %p46 = scmp.eq.s32.totalorder %s15, 1
    %p47 = por %p45, %p46
    %p48 = scmp.ne.s32.totalorder %s37, %s38
    %p49 = scmp.eq.s32.totalorder %s15, 0
    %p50 = por %p48, %p49
    %p51 = scmp.ne.s32.totalorder %s37, %s38
    %p52 = scmp.eq.s32.totalorder %s16, 1
    %p53 = por %p51, %p52
    %p55 = scmp.ne.s32.totalorder %s38, %s54
    %p56 = scmp.eq.s32.totalorder %s16, 0
    %p57 = por %p55, %p56
    %s58 = sadd.s32 %s17, %s18
    %s59 = sadd.s32 %s29, %s25
    %s60 = ssub.s32 %s58, %s59
    %p61 = scmp.eq.s32.totalorder %s60, 0
    %s63 = sadd.s32 %s62, 1
    %s64 = scalar_select %p61, %s62, %s63
    %p67 = pneg %p61
    %p68 = scmp.eq.s32.totalorder %s10, 1
    %p69 = por %p67, %p68
    %p70 = scmp.ne.s32.totalorder %s62, %s65
    %p71 = scmp.eq.s32.totalorder %s10, 0
    %p72 = por %p70, %p71
    %p73 = scmp.ne.s32.totalorder %s62, %s65
    %p74 = scmp.eq.s32.totalorder %s15, 1
    %p75 = por %p73, %p74
    %p76 = scmp.ne.s32.totalorder %s65, %s66
    %p77 = scmp.eq.s32.totalorder %s15, 0
    %p78 = por %p76, %p77
    %p79 = scmp.ne.s32.totalorder %s65, %s66
    %p80 = scmp.eq.s32.totalorder %s16, 1
    %p81 = por %p79, %p80
    %p83 = scmp.ne.s32.totalorder %s66, %s82
    %p84 = scmp.eq.s32.totalorder %s16, 0
    %p85 = por %p83, %p84
    %s86 = ssub.s32 %s17, %s29
    %p87 = scmp.eq.s32.totalorder %s86, 0
    %s89 = sadd.s32 %s88, 1
    %s90 = scalar_select %p87, %s88, %s89
    %p93 = pneg %p87
    %p94 = scmp.eq.s32.totalorder %s10, 1
    %p95 = por %p93, %p94
    %p96 = scmp.ne.s32.totalorder %s88, %s91
    %p97 = scmp.eq.s32.totalorder %s10, 0
    %p98 = por %p96, %p97
    %p99 = scmp.ne.s32.totalorder %s88, %s91
    %p100 = scmp.eq.s32.totalorder %s15, 1
    %p101 = por %p99, %p100
    %p102 = scmp.ne.s32.totalorder %s91, %s92
    %p103 = scmp.eq.s32.totalorder %s15, 0
    %p104 = por %p102, %p103
    %p105 = scmp.ne.s32.totalorder %s91, %s92
    %p106 = scmp.eq.s32.totalorder %s16, 1
    %p107 = por %p105, %p106
    %p109 = scmp.ne.s32.totalorder %s92, %s108
    %p110 = scmp.eq.s32.totalorder %s16, 0
    %p111 = por %p109, %p110
    %s112 = ssub.s32 %s17, %s29
    %p113 = scmp.eq.s32.totalorder %s112, 0
    %s115 = sadd.s32 %s114, 1
    %s116 = scalar_select %p113, %s114, %s115
    %p119 = pneg %p113
    %p120 = scmp.eq.s32.totalorder %s10, 1
    %p121 = por %p119, %p120
    %p122 = scmp.ne.s32.totalorder %s114, %s117
    %p123 = scmp.eq.s32.totalorder %s10, 0
    %p124 = por %p122, %p123
    %p125 = scmp.ne.s32.totalorder %s114, %s117
    %p126 = scmp.eq.s32.totalorder %s15, 1
    %p127 = por %p125, %p126
    %p128 = scmp.ne.s32.totalorder %s117, %s118
    %p129 = scmp.eq.s32.totalorder %s15, 0
    %p130 = por %p128, %p129
    %p131 = scmp.ne.s32.totalorder %s117, %s118
    %p132 = scmp.eq.s32.totalorder %s16, 1
    %p133 = por %p131, %p132
    %p135 = scmp.ne.s32.totalorder %s118, %s134
    %p136 = scmp.eq.s32.totalorder %s16, 0
    %p137 = por %p135, %p136
    %p138 = scmp.le.s32.totalorder 1, %s10
    %p139 = scmp.lt.s32.totalorder %s10, 3
    %p140 = pnand %p138, %p139
    %p141 = pneg %p140
    // Predicated region
    $region9: #{hist_loss.2} parent=5 // pred_check
      _
    $region10: #{hist_loss.2} parent=5 // pred_check_branch
      %143 = sbr.rel (%p140) target = $region12
    $region11: #{hist_loss.2} parent=5 // pred_region
      %s144 = ssub.s32 %s10, 1
    $region12: #{hist_loss.2} parent=5 // pred_fallthru
      _
    %p145 = scmp.lt.s32.totalorder %s10, 2
    // Predicated region
    $region13: #{hist_loss.2} parent=5 // pred_check
      %p146 = pneg %p145
    $region14: #{hist_loss.2} parent=5 // pred_check_branch
      %148 = sbr.rel (%p146) target = $region16
    $region15: #{hist_loss.2} parent=5 // pred_region
      // Predicated region
      $region17: #{hist_loss.2} parent=15 // pred_check
        %p149 = pneg %p44
      $region18: #{hist_loss.2} parent=15 // pred_check_branch
        %151 = sbr.rel (%p149) target = $region20
      $region19: #{hist_loss.2} parent=15 // pred_region
        %s152 = sadd.s32 %s17, %s18
        %s153 = smul.u32 8, %s152
        %p154 = scmp.lt.s32.totalorder %s153, 15
        %s155 = scalar_select %p154, %s153, 15
        %s156 = smul.addr %s155, 8
        %s157 = scalar_lea.vmem %s0, %s156
        %s158 = sadd.s32 %s17, %s18
        %s159 = smul.u32 8, %s158
      $region20: #{hist_loss.2} parent=15 // pred_fallthru
        _
      // Predicated region
      $region21: #{hist_loss.2} parent=15 // pred_check
        %p160 = pneg %p72
      $region22: #{hist_loss.2} parent=15 // pred_check_branch
        %162 = sbr.rel (%p160) target = $region24
      $region23: #{hist_loss.2} parent=15 // pred_region
        %s163 = sadd.s32 %s17, %s18
        %s164 = smul.u32 8, %s163
        %p165 = scmp.lt.s32.totalorder %s164, 15
        %s166 = scalar_select %p165, %s164, 15
        %s167 = smul.addr %s166, 8
        %s168 = scalar_lea.vmem %s1, %s167
        %s169 = sadd.s32 %s17, %s18
        %s170 = smul.u32 8, %s169
      $region24: #{hist_loss.2} parent=15 // pred_fallthru
        _
    $region16: #{hist_loss.2} parent=5 // pred_fallthru
      _
    %p171 = scmp.le.s32.totalorder 1, %s10
    %p172 = scmp.lt.s32.totalorder %s10, 3
    %p173 = pnand %p171, %p172
    %p174 = pneg %p173
    // Predicated region
    $region25: #{hist_loss.2} parent=5 // pred_check
      _
    $region26: #{hist_loss.2} parent=5 // pred_check_branch
      %176 = sbr.rel (%p173) target = $region28
    $region27: #{hist_loss.2} parent=5 // pred_region
      %s177 = ssub.s32 %s10, 1
      %s178 = sadd.s32 %s19, %s20
      %s179 = smul.u32 8, %s178
      %p180 = scmp.lt.s32.totalorder %s179, 15
      %s181 = scalar_select %p180, %s179, 15
      %s182 = smul.addr %s181, 8
      %s183 = scalar_lea.vmem %s0, %s182
      %p184 = pneg %p50
      %p185 = pneg %p47
      %s186 = sadd.s32 %s19, %s20
      %s187 = smul.u32 8, %s186
      %p188 = scmp.lt.s32.totalorder %s187, 15
      %s189 = scalar_select %p188, %s187, 15
      %s190 = smul.addr %s189, 8
      %s191 = scalar_lea.vmem %s1, %s190
      %p192 = pneg %p78
      %p193 = pneg %p75
      %p194 = pneg %p104
      %p195 = pneg %p101
      %p196 = scmp.lt.s32.totalorder %s19, 1
      %s197 = scalar_select %p196, %s19, 1
      %s198 = scalar_lea.vmem %s2, %s197
      %p199 = pneg %p130
      %p200 = pneg %p127
      %p201 = scmp.lt.s32.totalorder %s19, 1
      %s202 = scalar_select %p201, %s19, 1
      %s203 = scalar_lea.vmem %s3, %s202
      %s204 = sadd.s32 %s19, %s20
      %s205 = smul.u32 8, %s204
      %p206 = scmp.lt.s32.totalorder %s205, 15
      %s207 = scalar_select %p206, %s205, 15
      %s208 = smul.addr %s207, 8
      %s209 = scalar_lea.vmem %s0, %s208
      %s210 = sadd.s32 %s19, %s20
      %s211 = smul.u32 8, %s210
      %s212 = sadd.s32 %s19, %s20
      %s213 = smul.u32 8, %s212
      %p214 = scmp.lt.s32.totalorder %s213, 15
      %s215 = scalar_select %p214, %s213, 15
      %s216 = smul.addr %s215, 8
      %s217 = scalar_lea.vmem %s1, %s216
      %s218 = sadd.s32 %s19, %s20
      %s219 = smul.u32 8, %s218
      %p220 = scmp.lt.s32.totalorder %s19, 1
      %s221 = scalar_select %p220, %s19, 1
      %s222 = scalar_lea.vmem %s2, %s221
      %p223 = scmp.lt.s32.totalorder %s19, 1
      %s224 = scalar_select %p223, %s19, 1
      %s225 = scalar_lea.vmem %s3, %s224
      %p226 = scmp.eq.s32.totalorder %s20, 0
      // Predicated region
      $region29: #{hist_loss.2} parent=27 // pred_check
        %p227 = pneg %p226
      $region30: #{hist_loss.2} parent=27 // pred_check_branch
        %229 = sbr.rel (%p227) target = $region32
      $region31: #{hist_loss.2} parent=27 // pred_region
        %230 = vst [vmem:[%s222] sm:$0x1] inf
        %231 = vst [vmem:[%s225] sm:$0x1] -inf
      $region32: #{hist_loss.2} parent=27 // pred_fallthru
        _
      %v232 = vld [vmem:[%s209] sm:$0xff]
      %v233 = vld [vmem:[%s209 + $0x8] sm:$0xff]
      %v234 = vld [vmem:[%s209 + $0x10] sm:$0xff]
      %v235 = vld [vmem:[%s209 + $0x18] sm:$0xff]
      %v236 = vld [vmem:[%s209 + $0x20] sm:$0xff]
      %v237 = vld [vmem:[%s209 + $0x28] sm:$0xff]
      %v238 = vld [vmem:[%s209 + $0x30] sm:$0xff]
      %v239 = vld [vmem:[%s209 + $0x38] sm:$0xff]
      %v240 = vld [vmem:[%s217] sm:$0xff]
      %v241 = vld [vmem:[%s217 + $0x8] sm:$0xff]
      %v242 = vld [vmem:[%s217 + $0x10] sm:$0xff]
      %v243 = vld [vmem:[%s217 + $0x18] sm:$0xff]
      %v244 = vld [vmem:[%s217 + $0x20] sm:$0xff]
      %v245 = vld [vmem:[%s217 + $0x28] sm:$0xff]
      %v246 = vld [vmem:[%s217 + $0x30] sm:$0xff]
      %v247 = vld [vmem:[%s217 + $0x38] sm:$0xff]
      %vm248 = vcmp.ne.f32.partialorder %v232, %v232
      %vm249 = vcmp.ne.f32.partialorder %v233, %v233
      %vm250 = vcmp.ne.f32.partialorder %v234, %v234
      %vm251 = vcmp.ne.f32.partialorder %v235, %v235
      %vm252 = vcmp.ne.f32.partialorder %v236, %v236
      %vm253 = vcmp.ne.f32.partialorder %v237, %v237
      %vm254 = vcmp.ne.f32.partialorder %v238, %v238
      %vm255 = vcmp.ne.f32.partialorder %v239, %v239
      %vm256 = vcmp.ne.f32.partialorder %v240, %v240
      %vm257 = vcmp.ne.f32.partialorder %v241, %v241
      %vm258 = vcmp.ne.f32.partialorder %v242, %v242
      %vm259 = vcmp.ne.f32.partialorder %v243, %v243
      %vm260 = vcmp.ne.f32.partialorder %v244, %v244
      %vm261 = vcmp.ne.f32.partialorder %v245, %v245
      %vm262 = vcmp.ne.f32.partialorder %v246, %v246
      %vm263 = vcmp.ne.f32.partialorder %v247, %v247
      %v264 = vsel %vm248, inf, %v232
      %v265 = vsel %vm249, inf, %v233
      %v266 = vsel %vm250, inf, %v234
      %v267 = vsel %vm251, inf, %v235
      %v268 = vsel %vm252, inf, %v236
      %v269 = vsel %vm253, inf, %v237
      %v270 = vsel %vm254, inf, %v238
      %v271 = vsel %vm255, inf, %v239
      %v272 = vsel %vm256, inf, %v240
      %v273 = vsel %vm257, inf, %v241
      %v274 = vsel %vm258, inf, %v242
      %v275 = vsel %vm259, inf, %v243
      %v276 = vsel %vm260, inf, %v244
      %v277 = vsel %vm261, inf, %v245
      %v278 = vsel %vm262, inf, %v246
      %v279 = vsel %vm263, inf, %v247
      %v280 = vmin.f32 %v264, %v272
      %v281 = vmin.f32 %v265, %v273
      %v282 = vmin.f32 %v266, %v274
      %v283 = vmin.f32 %v267, %v275
      %v284 = vmin.f32 %v268, %v276
      %v285 = vmin.f32 %v269, %v277
      %v286 = vmin.f32 %v270, %v278
      %v287 = vmin.f32 %v271, %v279
      %v288 = vsel %vm248, -inf, %v232
      %v289 = vsel %vm249, -inf, %v233
      %v290 = vsel %vm250, -inf, %v234
      %v291 = vsel %vm251, -inf, %v235
      %v292 = vsel %vm252, -inf, %v236
      %v293 = vsel %vm253, -inf, %v237
      %v294 = vsel %vm254, -inf, %v238
      %v295 = vsel %vm255, -inf, %v239
      %v296 = vsel %vm256, -inf, %v240
      %v297 = vsel %vm257, -inf, %v241
      %v298 = vsel %vm258, -inf, %v242
      %v299 = vsel %vm259, -inf, %v243
      %v300 = vsel %vm260, -inf, %v244
      %v301 = vsel %vm261, -inf, %v245
      %v302 = vsel %vm262, -inf, %v246
      %v303 = vsel %vm263, -inf, %v247
      %v304 = vmax.f32 %v288, %v296
      %v305 = vmax.f32 %v289, %v297
      %v306 = vmax.f32 %v290, %v298
      %v307 = vmax.f32 %v291, %v299
      %v308 = vmax.f32 %v292, %v300
      %v309 = vmax.f32 %v293, %v301
      %v310 = vmax.f32 %v294, %v302
      %v311 = vmax.f32 %v295, %v303
      %v312 = vld [vmem:[%s222] sm:$0x1]
      %v313 = vmin.f32 %v280, %v284
      %v314 = vmin.f32 %v281, %v285
      %v315 = vmin.f32 %v282, %v286
      %v316 = vmin.f32 %v283, %v287
      %v317 = vmin.f32 %v313, %v314
      %v318 = vmin.f32 %v315, %v316
      %v319 = vmin.f32 %v317, %v318
      %v320 = vrot.slane %v319, 4
      %v321 = vmin.f32 %v319, %v320
      %v322 = vrot.slane %v321, 2
      %v323 = vmin.f32 %v321, %v322
      %v324 = vrot.slane %v323, 1
      %v325 = vmin.f32 %v323, %v324
      %v326 = vmin.f32 %v312, %v325
      %327 = vst [vmem:[%s222] sm:$0x1] %v326
      %v328 = vld [vmem:[%s225] sm:$0x1]
      %v329 = vmax.f32 %v304, %v308
      %v330 = vmax.f32 %v305, %v309
      %v331 = vmax.f32 %v306, %v310
      %v332 = vmax.f32 %v307, %v311
      %v333 = vmax.f32 %v329, %v330
      %v334 = vmax.f32 %v331, %v332
      %v335 = vmax.f32 %v333, %v334
      %v336 = vrot.slane %v335, 4
      %v337 = vmax.f32 %v335, %v336
      %v338 = vrot.slane %v337, 2
      %v339 = vmax.f32 %v337, %v338
      %v340 = vrot.slane %v339, 1
      %v341 = vmax.f32 %v339, %v340
      %v342 = vmax.f32 %v328, %v341
      %343 = vst [vmem:[%s225] sm:$0x1] %v342
      %p344 = scmp.lt.s32.totalorder %s19, 1
      %s345 = scalar_select %p344, %s19, 1
      %s346 = scalar_lea.vmem %s2, %s345
      %p347 = scmp.lt.s32.totalorder %s19, 1
      %s348 = scalar_select %p347, %s19, 1
      %s349 = scalar_lea.vmem %s3, %s348
      // Predicated region
      $region33: #{hist_loss.2} parent=27 // pred_check
        %p350 = pneg %p101
      $region34: #{hist_loss.2} parent=27 // pred_check_branch
        %352 = sbr.rel (%p350) target = $region36
      $region35: #{hist_loss.2} parent=27 // pred_region
        _
      $region36: #{hist_loss.2} parent=27 // pred_fallthru
        _
      // Predicated region
      $region37: #{hist_loss.2} parent=27 // pred_check
        %p353 = pneg %p127
      $region38: #{hist_loss.2} parent=27 // pred_check_branch
        %355 = sbr.rel (%p353) target = $region40
      $region39: #{hist_loss.2} parent=27 // pred_region
        _
      $region40: #{hist_loss.2} parent=27 // pred_fallthru
        _
    $region28: #{hist_loss.2} parent=5 // pred_fallthru
      _
    %p356 = scmp.le.s32.totalorder 2, %s10
    // Predicated region
    $region41: #{hist_loss.2} parent=5 // pred_check
      %p357 = pneg %p356
    $region42: #{hist_loss.2} parent=5 // pred_check_branch
      %359 = sbr.rel (%p357) target = $region44
    $region43: #{hist_loss.2} parent=5 // pred_region
      %s360 = ssub.s32 %s10, 2
      // Predicated region
      $region45: #{hist_loss.2} parent=43 // pred_check
        %p361 = pneg %p107
      $region46: #{hist_loss.2} parent=43 // pred_check_branch
        %363 = sbr.rel (%p361) target = $region48
      $region47: #{hist_loss.2} parent=43 // pred_region
        %p364 = scmp.lt.s32.totalorder %s21, 1
        %s365 = scalar_select %p364, %s21, 1
        %s366 = scalar_lea.vmem %s2, %s365
      $region48: #{hist_loss.2} parent=43 // pred_fallthru
        _
      // Predicated region
      $region49: #{hist_loss.2} parent=43 // pred_check
        %p367 = pneg %p133
      $region50: #{hist_loss.2} parent=43 // pred_check_branch
        %369 = sbr.rel (%p367) target = $region52
      $region51: #{hist_loss.2} parent=43 // pred_region
        %p370 = scmp.lt.s32.totalorder %s21, 1
        %s371 = scalar_select %p370, %s21, 1
        %s372 = scalar_lea.vmem %s3, %s371
      $region52: #{hist_loss.2} parent=43 // pred_fallthru
        _
    $region44: #{hist_loss.2} parent=5 // pred_fallthru
      _
  $region6: #{hist_loss.2} parent=0 // loop_footer
    %s14 = sadd.s32 1, %s10
  $region7: #{hist_loss.2} parent=0 // loop_footer_branch
    %9 = sbr.rel target = $region3
  $region8: #{hist_loss.2} parent=0 // loop_exit
    _

// kernel: hist_loss.3
$region0: #{hist_loss.3}
  #allocation0 [shape = 'u32[]', space=smem, size = 0x4, offset = 0x4, fixed_abs, tag = 'smem constant byte address 0x4 - core index']
  #allocation1 [shape = 'u32[144,128]{1,0:T(1,128)}', space=vmem, size = 0x12000, scoped, tag = 'internal scratch']
  %s0 = inlined_call_operand.vmem [shape: f32[3], index: 0, kind: input, shape index: {}]
  %s1 = inlined_call_operand.vmem [shape: f32[128,128], index: 1, kind: input, shape index: {}]
  %s2 = inlined_call_operand.vmem [shape: f32[128,128], index: 2, kind: input, shape index: {}]
  %s3 = inlined_call_operand.vmem [shape: s32[1,256], index: 3, kind: output, shape index: {0}]
  %s4 = inlined_call_operand.vmem [shape: s32[1,256], index: 4, kind: output, shape index: {1}]
  %5 = xla_tuple %s3, %s4
  %s6 = sld [smem:[#allocation0]]
  $region75: #{hist_loss.3} parent=0
    _
  %s8 = ssub.s32 1, %s6
  %s9 = scalar_select 0, %s8, %s6
  $region1: #{hist_loss.3} parent=0
    #allocation2 [shape = 'u8[512]{0}', space=smem, size = 0x200, scoped, tag = 'input window, operand 0, single buffered']
    #allocation3 [shape = 's32[2]{0}', space=sflag, size = 0x8, scoped, tag = 'scoped memory for hist_loss.3']
    %10 = vsyncpa [#allocation3], 0
    loop: start=0, step=1, limit=4
    $region2: #{hist_loss.3} parent=1 // loop_pre_header
      _
    $region3: #{hist_loss.3} parent=1 // loop_header
      %s12 = sphi 0, %s16
      %p13 = scmp.ge.s32.totalorder %s12, 4
      %s19 = sphi 0, %s31
      %s20 = sphi 0, %s27
      %s21 = sphi 0, %s19
      %s22 = sphi 0, %s20
      %s23 = sphi 0, %s21
      %s24 = sphi 0, %s22
      %s32 = sphi 0, %s32
      %s34 = sphi 0, %s32
      %s35 = sphi 0, %s34
      %s49 = sphi 0, %s35
      %s57 = sphi 0, %s59
      %s60 = sphi 0, %s57
      %s61 = sphi 0, %s60
      %s77 = sphi 0, %s61
      %s85 = sphi 0, %s87
      %s88 = sphi 0, %s85
      %s89 = sphi 0, %s88
      %s105 = sphi 0, %s89
      %s111 = sphi 0, %s113
      %s114 = sphi 0, %s111
      %s115 = sphi 0, %s114
      %s131 = sphi 0, %s115
      %s137 = sphi 0, %s139
      %s140 = sphi 0, %s137
      %s141 = sphi 0, %s140
      %s157 = sphi 0, %s141
    $region4: #{hist_loss.3} parent=1 // loop_header_branch
      %15 = sbr.rel (%p13) target = $region8
    $region5: #{hist_loss.3} parent=1 // loop_body
      %s17 = ssub.s32 %s12, 1
      %s18 = ssub.s32 %s12, 2
      %s25 = sadd.s32 1, %s20
      %p26 = scmp.ge.s32.totalorder %s25, 1
      %s27 = scalar_select %p26, 0, %s25
      %s28 = sadd.s32 1, %s19
      %s29 = scalar_select %p26, %s28, %s19
      %p30 = scmp.ge.s32.totalorder %s29, 2
      %s31 = scalar_select %p30, 0, %s29
      %s33 = sadd.s32 %s32, 1
      %p36 = scmp.eq.s32.totalorder %s12, 1
      %p37 = scmp.ne.s32.totalorder %s32, %s34
      %p38 = scmp.eq.s32.totalorder %s12, 0
      %p39 = por %p37, %p38
      %p40 = scmp.ne.s32.totalorder %s32, %s34
      %p41 = scmp.eq.s32.totalorder %s17, 1
      %p42 = por %p40, %p41
      %p43 = scmp.ne.s32.totalorder %s34, %s35
      %p44 = scmp.eq.s32.totalorder %s17, 0
      %p45 = por %p43, %p44
      %p46 = scmp.ne.s32.totalorder %s34, %s35
      %p47 = scmp.eq.s32.totalorder %s18, 1
      %p48 = por %p46, %p47
      %p50 = scmp.ne.s32.totalorder %s35, %s49
      %p51 = scmp.eq.s32.totalorder %s18, 0
      %p52 = por %p50, %p51
      %s53 = sadd.s32 %s19, %s20
      %s54 = sadd.s32 %s31, %s27
      %s55 = ssub.s32 %s53, %s54
      %p56 = scmp.eq.s32.totalorder %s55, 0
      %s58 = sadd.s32 %s57, 1
      %s59 = scalar_select %p56, %s57, %s58
      %p62 = pneg %p56
      %p63 = scmp.eq.s32.totalorder %s12, 1
      %p64 = por %p62, %p63
      %p65 = scmp.ne.s32.totalorder %s57, %s60
      %p66 = scmp.eq.s32.totalorder %s12, 0
      %p67 = por %p65, %p66
      %p68 = scmp.ne.s32.totalorder %s57, %s60
      %p69 = scmp.eq.s32.totalorder %s17, 1
      %p70 = por %p68, %p69
      %p71 = scmp.ne.s32.totalorder %s60, %s61
      %p72 = scmp.eq.s32.totalorder %s17, 0
      %p73 = por %p71, %p72
      %p74 = scmp.ne.s32.totalorder %s60, %s61
      %p75 = scmp.eq.s32.totalorder %s18, 1
      %p76 = por %p74, %p75
      %p78 = scmp.ne.s32.totalorder %s61, %s77
      %p79 = scmp.eq.s32.totalorder %s18, 0
      %p80 = por %p78, %p79
      %s81 = sadd.s32 %s19, %s20
      %s82 = sadd.s32 %s31, %s27
      %s83 = ssub.s32 %s81, %s82
      %p84 = scmp.eq.s32.totalorder %s83, 0
      %s86 = sadd.s32 %s85, 1
      %s87 = scalar_select %p84, %s85, %s86
      %p90 = pneg %p84
      %p91 = scmp.eq.s32.totalorder %s12, 1
      %p92 = por %p90, %p91
      %p93 = scmp.ne.s32.totalorder %s85, %s88
      %p94 = scmp.eq.s32.totalorder %s12, 0
      %p95 = por %p93, %p94
      %p96 = scmp.ne.s32.totalorder %s85, %s88
      %p97 = scmp.eq.s32.totalorder %s17, 1
      %p98 = por %p96, %p97
      %p99 = scmp.ne.s32.totalorder %s88, %s89
      %p100 = scmp.eq.s32.totalorder %s17, 0
      %p101 = por %p99, %p100
      %p102 = scmp.ne.s32.totalorder %s88, %s89
      %p103 = scmp.eq.s32.totalorder %s18, 1
      %p104 = por %p102, %p103
      %p106 = scmp.ne.s32.totalorder %s89, %s105
      %p107 = scmp.eq.s32.totalorder %s18, 0
      %p108 = por %p106, %p107
      %s109 = ssub.s32 %s19, %s31
      %p110 = scmp.eq.s32.totalorder %s109, 0
      %s112 = sadd.s32 %s111, 1
      %s113 = scalar_select %p110, %s111, %s112
      %p116 = pneg %p110
      %p117 = scmp.eq.s32.totalorder %s12, 1
      %p118 = por %p116, %p117
      %p119 = scmp.ne.s32.totalorder %s111, %s114
      %p120 = scmp.eq.s32.totalorder %s12, 0
      %p121 = por %p119, %p120
      %p122 = scmp.ne.s32.totalorder %s111, %s114
      %p123 = scmp.eq.s32.totalorder %s17, 1
      %p124 = por %p122, %p123
      %p125 = scmp.ne.s32.totalorder %s114, %s115
      %p126 = scmp.eq.s32.totalorder %s17, 0
      %p127 = por %p125, %p126
      %p128 = scmp.ne.s32.totalorder %s114, %s115
      %p129 = scmp.eq.s32.totalorder %s18, 1
      %p130 = por %p128, %p129
      %p132 = scmp.ne.s32.totalorder %s115, %s131
      %p133 = scmp.eq.s32.totalorder %s18, 0
      %p134 = por %p132, %p133
      %s135 = ssub.s32 %s19, %s31
      %p136 = scmp.eq.s32.totalorder %s135, 0
      %s138 = sadd.s32 %s137, 1
      %s139 = scalar_select %p136, %s137, %s138
      %p142 = pneg %p136
      %p143 = scmp.eq.s32.totalorder %s12, 1
      %p144 = por %p142, %p143
      %p145 = scmp.ne.s32.totalorder %s137, %s140
      %p146 = scmp.eq.s32.totalorder %s12, 0
      %p147 = por %p145, %p146
      %p148 = scmp.ne.s32.totalorder %s137, %s140
      %p149 = scmp.eq.s32.totalorder %s17, 1
      %p150 = por %p148, %p149
      %p151 = scmp.ne.s32.totalorder %s140, %s141
      %p152 = scmp.eq.s32.totalorder %s17, 0
      %p153 = por %p151, %p152
      %p154 = scmp.ne.s32.totalorder %s140, %s141
      %p155 = scmp.eq.s32.totalorder %s18, 1
      %p156 = por %p154, %p155
      %p158 = scmp.ne.s32.totalorder %s141, %s157
      %p159 = scmp.eq.s32.totalorder %s18, 0
      %p160 = por %p158, %p159
      %p161 = scmp.le.s32.totalorder 1, %s12
      %p162 = scmp.lt.s32.totalorder %s12, 3
      %p163 = pnand %p161, %p162
      %p164 = pneg %p163
      // Predicated region
      $region9: #{hist_loss.3} parent=5 // pred_check
        _
      $region10: #{hist_loss.3} parent=5 // pred_check_branch
        %166 = sbr.rel (%p163) target = $region12
      $region11: #{hist_loss.3} parent=5 // pred_region
        %s167 = ssub.s32 %s12, 1
        // Predicated region
        $region13: #{hist_loss.3} parent=11 // pred_check
          %p168 = pneg %p45
        $region14: #{hist_loss.3} parent=11 // pred_check_branch
          %170 = sbr.rel (%p168) target = $region16
        $region15: #{hist_loss.3} parent=11 // pred_region
          %s172 = ssub.s32 16, 16
          %173 = vsyncadd [#allocation3], %s172
          %s175 = sshll.u32 %s0, 4
          %s176 = int_to_ptr.vmem [resolvable:$true] %s175
          %178 = dma.vmem_to_smem %s176, 16, [#allocation2], [#allocation3]
        $region16: #{hist_loss.3} parent=11 // pred_fallthru
          _
      $region12: #{hist_loss.3} parent=5 // pred_fallthru
        _
      %p179 = scmp.lt.s32.totalorder %s12, 2
      // Predicated region
      $region17: #{hist_loss.3} parent=5 // pred_check
        %p180 = pneg %p179
      $region18: #{hist_loss.3} parent=5 // pred_check_branch
        %182 = sbr.rel (%p180) target = $region20
      $region19: #{hist_loss.3} parent=5 // pred_region
        // Predicated region
        $region21: #{hist_loss.3} parent=19 // pred_check
          %p183 = pneg %p67
        $region22: #{hist_loss.3} parent=19 // pred_check_branch
          %185 = sbr.rel (%p183) target = $region24
        $region23: #{hist_loss.3} parent=19 // pred_region
          %s186 = sadd.s32 %s19, %s20
          %s187 = smul.u32 8, %s186
          %p188 = scmp.lt.s32.totalorder %s187, 15
          %s189 = scalar_select %p188, %s187, 15
          %s190 = smul.addr %s189, 8
          %s191 = scalar_lea.vmem %s1, %s190
          %s192 = sadd.s32 %s19, %s20
          %s193 = smul.u32 8, %s192
        $region24: #{hist_loss.3} parent=19 // pred_fallthru
          _
        // Predicated region
        $region25: #{hist_loss.3} parent=19 // pred_check
          %p194 = pneg %p95
        $region26: #{hist_loss.3} parent=19 // pred_check_branch
          %196 = sbr.rel (%p194) target = $region28
        $region27: #{hist_loss.3} parent=19 // pred_region
          %s197 = sadd.s32 %s19, %s20
          %s198 = smul.u32 8, %s197
          %p199 = scmp.lt.s32.totalorder %s198, 15
          %s200 = scalar_select %p199, %s198, 15
          %s201 = smul.addr %s200, 8
          %s202 = scalar_lea.vmem %s2, %s201
          %s203 = sadd.s32 %s19, %s20
          %s204 = smul.u32 8, %s203
        $region28: #{hist_loss.3} parent=19 // pred_fallthru
          _
      $region20: #{hist_loss.3} parent=5 // pred_fallthru
        _
      %p205 = scmp.le.s32.totalorder 1, %s12
      %p206 = scmp.lt.s32.totalorder %s12, 3
      %p207 = pnand %p205, %p206
      %p208 = pneg %p207
      // Predicated region
      $region29: #{hist_loss.3} parent=5 // pred_check
        _
      $region30: #{hist_loss.3} parent=5 // pred_check_branch
        %210 = sbr.rel (%p207) target = $region32
      $region31: #{hist_loss.3} parent=5 // pred_region
        %s211 = ssub.s32 %s12, 1
        // Predicated region
        $region33: #{hist_loss.3} parent=31 // pred_check
          %p212 = pneg %p45
        $region34: #{hist_loss.3} parent=31 // pred_check_branch
          %214 = sbr.rel (%p212) target = $region36
        $region35: #{hist_loss.3} parent=31 // pred_region
          %215 = dma.done [#allocation3], 16
        $region36: #{hist_loss.3} parent=31 // pred_fallthru
          _
        %216 = sfence
        %p217 = pneg %p45
        %p218 = pneg %p42
        %s219 = sadd.s32 %s21, %s22
        %s220 = smul.u32 8, %s219
        %p221 = scmp.lt.s32.totalorder %s220, 15
        %s222 = scalar_select %p221, %s220, 15
        %s223 = smul.addr %s222, 8
        %s224 = scalar_lea.vmem %s1, %s223
        %p225 = pneg %p73
        %p226 = pneg %p70
        %s227 = sadd.s32 %s21, %s22
        %s228 = smul.u32 8, %s227
        %p229 = scmp.lt.s32.totalorder %s228, 15
        %s230 = scalar_select %p229, %s228, 15
        %s231 = smul.addr %s230, 8
        %s232 = scalar_lea.vmem %s2, %s231
        %p233 = pneg %p101
        %p234 = pneg %p98
        %p235 = pneg %p127
        %p236 = pneg %p124
        %p237 = scmp.lt.s32.totalorder %s21, 1
        %s238 = scalar_select %p237, %s21, 1
        %s239 = scalar_lea.vmem %s3, %s238
        %p240 = pneg %p153
        %p241 = pneg %p150
        %p242 = scmp.lt.s32.totalorder %s21, 1
        %s243 = scalar_select %p242, %s21, 1
        %s244 = scalar_lea.vmem %s4, %s243
        %s245 = sadd.s32 %s21, %s22
        %s246 = smul.u32 8, %s245
        %p247 = scmp.lt.s32.totalorder %s246, 15
        %s248 = scalar_select %p247, %s246, 15
        %s249 = smul.addr %s248, 8
        %s250 = scalar_lea.vmem %s1, %s249
        %s251 = sadd.s32 %s21, %s22
        %s252 = smul.u32 8, %s251
        %s253 = sadd.s32 %s21, %s22
        %s254 = smul.u32 8, %s253
        %p255 = scmp.lt.s32.totalorder %s254, 15
        %s256 = scalar_select %p255, %s254, 15
        %s257 = smul.addr %s256, 8
        %s258 = scalar_lea.vmem %s2, %s257
        %s259 = sadd.s32 %s21, %s22
        %s260 = smul.u32 8, %s259
        %p261 = scmp.lt.s32.totalorder %s21, 1
        %s262 = scalar_select %p261, %s21, 1
        %s263 = scalar_lea.vmem %s3, %s262
        %p264 = scmp.lt.s32.totalorder %s21, 1
        %s265 = scalar_select %p264, %s21, 1
        %s266 = scalar_lea.vmem %s4, %s265
        %p267 = scmp.eq.s32.totalorder %s22, 0
        // Predicated region
        $region37: #{hist_loss.3} parent=31 // pred_check
          %p268 = pneg %p267
        $region38: #{hist_loss.3} parent=31 // pred_check_branch
          %270 = sbr.rel (%p268) target = $region40
        $region39: #{hist_loss.3} parent=31 // pred_region
          %271 = vst [vmem:[%s263] sm:$0x1] 0
          %272 = vst [vmem:[%s266] sm:$0x1] 0
        $region40: #{hist_loss.3} parent=31 // pred_fallthru
          _
        %s273 = sld [smem:[#allocation2]]
        %s274 = sld [smem:[#allocation2 + $0x1]]
        %s275 = sld [smem:[#allocation2 + $0x2]]
        %v276 = vlaneseq
        %v277 = vand.u32 %v276, 127
        %v278 = vld [vmem:[%s263] sm:$0x1]
        loop: start=0, step=1, limit=64
        $region41: #{hist_loss.3} parent=31 // loop_pre_header
          _
        $region42: #{hist_loss.3} parent=31 // loop_header
          %s280 = sphi 0, %s284
          %p281 = scmp.ge.s32.totalorder %s280, 64
          %v285 = vphi 0.0, %v455
        $region43: #{hist_loss.3} parent=31 // loop_header_branch
          %283 = sbr.rel (%p281) target = $region47
        $region44: #{hist_loss.3} parent=31 // loop_body
          %s286 = scalar_lea.vmem %s250, %s280
          %v287 = vld [vmem:[%s286] sm:$0x1]
          %v288 = vstv %s273
          %vm289 = vcmp.ge.f32.partialorder %v287, %v288
          %v290 = vstv %s274
          %vm291 = vcmp.le.f32.partialorder %v287, %v290
          %vm292 = vmand %vm289, %vm291
          %v293 = vsub.f32 %v287, %v288
          %v294 = vstv %s275
          %v295 = vmul.f32 %v293, %v294
          %v296 = vfloor.f32 %v295
          %v297 = vcvt.f32.s32.to.zero.pseudo %v296
          %vm298 = vcmp.gt.s32.totalorder %v297, 0
          %v299 = vsel %vm298, %v297, 0
          %vm300 = vcmp.lt.s32.totalorder %v299, 99
          %v301 = vsel %vm300, %v299, 99
          %v302 = vsel %vm292, %v301, 127
          %v303 = vlaneseq
          %v304 = vshrl.u32 %v303, 7
          %v305 = vsub.s32 0, %v304
          %v306 = vrot.slane %v302, %v305
          %308 = vbcast.lane.b32.xlu0 %v306, 256
          %v309 = vpop.permute.xlu0 %308
          %s311 = sor.u32 256, 8
          %312 = vbcast.lane.b32.xlu0 %v306, %s311
          %v313 = vpop.permute.xlu0 %312
          %s315 = sor.u32 256, 16
          %316 = vbcast.lane.b32.xlu0 %v306, %s315
          %v317 = vpop.permute.xlu0 %316
          %s319 = sor.u32 256, 24
          %320 = vbcast.lane.b32.xlu0 %v306, %s319
          %v321 = vpop.permute.xlu0 %320
          %s323 = sor.u32 256, 32
          %324 = vbcast.lane.b32.xlu0 %v306, %s323
          %v325 = vpop.permute.xlu0 %324
          %s327 = sor.u32 256, 40
          %328 = vbcast.lane.b32.xlu0 %v306, %s327
          %v329 = vpop.permute.xlu0 %328
          %s331 = sor.u32 256, 48
          %332 = vbcast.lane.b32.xlu0 %v306, %s331
          %v333 = vpop.permute.xlu0 %332
          %s335 = sor.u32 256, 56
          %336 = vbcast.lane.b32.xlu0 %v306, %s335
          %v337 = vpop.permute.xlu0 %336
          %s339 = sor.u32 256, 64
          %340 = vbcast.lane.b32.xlu0 %v306, %s339
          %v341 = vpop.permute.xlu0 %340
          %s343 = sor.u32 256, 72
          %344 = vbcast.lane.b32.xlu0 %v306, %s343
          %v345 = vpop.permute.xlu0 %344
          %s347 = sor.u32 256, 80
          %348 = vbcast.lane.b32.xlu0 %v306, %s347
          %v349 = vpop.permute.xlu0 %348
          %s351 = sor.u32 256, 88
          %352 = vbcast.lane.b32.xlu0 %v306, %s351
          %v353 = vpop.permute.xlu0 %352
          %s355 = sor.u32 256, 96
          %356 = vbcast.lane.b32.xlu0 %v306, %s355
          %v357 = vpop.permute.xlu0 %356
          %s359 = sor.u32 256, 104
          %360 = vbcast.lane.b32.xlu0 %v306, %s359
          %v361 = vpop.permute.xlu0 %360
          %s363 = sor.u32 256, 112
          %364 = vbcast.lane.b32.xlu0 %v306, %s363
          %v365 = vpop.permute.xlu0 %364
          %s367 = sor.u32 256, 120
          %368 = vbcast.lane.b32.xlu0 %v306, %s367
          %v369 = vpop.permute.xlu0 %368
          %vm370 = vcmp.eq.s32.totalorder %v309, %v277
          %vm371 = vcmp.eq.s32.totalorder %v313, %v277
          %vm372 = vcmp.eq.s32.totalorder %v317, %v277
          %vm373 = vcmp.eq.s32.totalorder %v321, %v277
          %vm374 = vcmp.eq.s32.totalorder %v325, %v277
          %vm375 = vcmp.eq.s32.totalorder %v329, %v277
          %vm376 = vcmp.eq.s32.totalorder %v333, %v277
          %vm377 = vcmp.eq.s32.totalorder %v337, %v277
          %vm378 = vcmp.eq.s32.totalorder %v341, %v277
          %vm379 = vcmp.eq.s32.totalorder %v345, %v277
          %vm380 = vcmp.eq.s32.totalorder %v349, %v277
          %vm381 = vcmp.eq.s32.totalorder %v353, %v277
          %vm382 = vcmp.eq.s32.totalorder %v357, %v277
          %vm383 = vcmp.eq.s32.totalorder %v361, %v277
          %vm384 = vcmp.eq.s32.totalorder %v365, %v277
          %vm385 = vcmp.eq.s32.totalorder %v369, %v277
          %v386 = vsel %vm370, 1, 0
          %v387 = vsel %vm371, 1, 0
          %v388 = vsel %vm372, 1, 0
          %v389 = vsel %vm373, 1, 0
          %v390 = vsel %vm374, 1, 0
          %v391 = vsel %vm375, 1, 0
          %v392 = vsel %vm376, 1, 0
          %v393 = vsel %vm377, 1, 0
          %v394 = vsel %vm378, 1, 0
          %v395 = vsel %vm379, 1, 0
          %v396 = vsel %vm380, 1, 0
          %v397 = vsel %vm381, 1, 0
          %v398 = vsel %vm382, 1, 0
          %v399 = vsel %vm383, 1, 0
          %v400 = vsel %vm384, 1, 0
          %v401 = vsel %vm385, 1, 0
          %v402 = vcvt.s32.f32 %v386
          %v403 = vcvt.s32.f32 %v387
          %v404 = vcvt.s32.f32 %v388
          %v405 = vcvt.s32.f32 %v389
          %v406 = vcvt.s32.f32 %v390
          %v407 = vcvt.s32.f32 %v391
          %v408 = vcvt.s32.f32 %v392
          %v409 = vcvt.s32.f32 %v393
          %v410 = vcvt.s32.f32 %v394
          %v411 = vcvt.s32.f32 %v395
          %v412 = vcvt.s32.f32 %v396
          %v413 = vcvt.s32.f32 %v397
          %v414 = vcvt.s32.f32 %v398
          %v415 = vcvt.s32.f32 %v399
          %v416 = vcvt.s32.f32 %v400
          %v417 = vcvt.s32.f32 %v401
          %v418 = vadd.f32 %v402, 0.0
          %v419 = vadd.f32 %v403, 0.0
          %v420 = vadd.f32 %v404, 0.0
          %v421 = vadd.f32 %v405, 0.0
          %v422 = vadd.f32 %v406, 0.0
          %v423 = vadd.f32 %v407, 0.0
          %v424 = vadd.f32 %v408, 0.0
          %v425 = vadd.f32 %v409, 0.0
          %v426 = vadd.f32 %v410, 0.0
          %v427 = vadd.f32 %v411, 0.0
          %v428 = vadd.f32 %v412, 0.0
          %v429 = vadd.f32 %v413, 0.0
          %v430 = vadd.f32 %v414, 0.0
          %v431 = vadd.f32 %v415, 0.0
          %v432 = vadd.f32 %v416, 0.0
          %v433 = vadd.f32 %v417, 0.0
          %v434 = vadd.f32 %v418, %v419
          %v435 = vadd.f32 %v434, %v420
          %v436 = vadd.f32 %v435, %v421
          %v437 = vadd.f32 %v436, %v422
          %v438 = vadd.f32 %v437, %v423
          %v439 = vadd.f32 %v438, %v424
          %v440 = vadd.f32 %v439, %v425
          %v441 = vadd.f32 %v440, %v426
          %v442 = vadd.f32 %v441, %v427
          %v443 = vadd.f32 %v442, %v428
          %v444 = vadd.f32 %v443, %v429
          %v445 = vadd.f32 %v444, %v430
          %v446 = vadd.f32 %v445, %v431
          %v447 = vadd.f32 %v446, %v432
          %v448 = vadd.f32 %v447, %v433
          %v449 = vrot.slane %v448, 4
          %v450 = vadd.f32 %v448, %v449
          %v451 = vrot.slane %v450, 2
          %v452 = vadd.f32 %v450, %v451
          %v453 = vrot.slane %v452, 1
          %v454 = vadd.f32 %v452, %v453
          %v455 = vadd.f32 %v285, %v454
        $region45: #{hist_loss.3} parent=31 // loop_footer
          %s284 = sadd.s32 1, %s280
        $region46: #{hist_loss.3} parent=31 // loop_footer_branch
          %279 = sbr.rel target = $region42
        $region47: #{hist_loss.3} parent=31 // loop_exit
          _
        %v456 = vcvt.f32.s32.to.zero.pseudo %v285
        %v457 = vadd.s32 %v278, %v456
        %458 = vst [vmem:[%s263] sm:$0x1] %v457
        %v459 = vld [vmem:[%s266] sm:$0x1]
        loop: start=0, step=1, limit=64
        $region48: #{hist_loss.3} parent=31 // loop_pre_header
          _
        $region49: #{hist_loss.3} parent=31 // loop_header
          %s461 = sphi 0, %s465
          %p462 = scmp.ge.s32.totalorder %s461, 64
          %v466 = vphi 0.0, %v636
        $region50: #{hist_loss.3} parent=31 // loop_header_branch
          %464 = sbr.rel (%p462) target = $region54
        $region51: #{hist_loss.3} parent=31 // loop_body
          %s467 = scalar_lea.vmem %s258, %s461
          %v468 = vld [vmem:[%s467] sm:$0x1]
          %v469 = vstv %s273
          %vm470 = vcmp.ge.f32.partialorder %v468, %v469
          %v471 = vstv %s274
          %vm472 = vcmp.le.f32.partialorder %v468, %v471
          %vm473 = vmand %vm470, %vm472
          %v474 = vsub.f32 %v468, %v469
          %v475 = vstv %s275
          %v476 = vmul.f32 %v474, %v475
          %v477 = vfloor.f32 %v476
          %v478 = vcvt.f32.s32.to.zero.pseudo %v477
          %vm479 = vcmp.gt.s32.totalorder %v478, 0
          %v480 = vsel %vm479, %v478, 0
          %vm481 = vcmp.lt.s32.totalorder %v480, 99
          %v482 = vsel %vm481, %v480, 99
          %v483 = vsel %vm473, %v482, 127
          %v484 = vlaneseq
          %v485 = vshrl.u32 %v484, 7
          %v486 = vsub.s32 0, %v485
          %v487 = vrot.slane %v483, %v486
          %489 = vbcast.lane.b32.xlu0 %v487, 256
          %v490 = vpop.permute.xlu0 %489
          %s492 = sor.u32 256, 8
          %493 = vbcast.lane.b32.xlu0 %v487, %s492
          %v494 = vpop.permute.xlu0 %493
          %s496 = sor.u32 256, 16
          %497 = vbcast.lane.b32.xlu0 %v487, %s496
          %v498 = vpop.permute.xlu0 %497
          %s500 = sor.u32 256, 24
          %501 = vbcast.lane.b32.xlu0 %v487, %s500
          %v502 = vpop.permute.xlu0 %501
          %s504 = sor.u32 256, 32
          %505 = vbcast.lane.b32.xlu0 %v487, %s504
          %v506 = vpop.permute.xlu0 %505
          %s508 = sor.u32 256, 40
          %509 = vbcast.lane.b32.xlu0 %v487, %s508
          %v510 = vpop.permute.xlu0 %509
          %s512 = sor.u32 256, 48
          %513 = vbcast.lane.b32.xlu0 %v487, %s512
          %v514 = vpop.permute.xlu0 %513
          %s516 = sor.u32 256, 56
          %517 = vbcast.lane.b32.xlu0 %v487, %s516
          %v518 = vpop.permute.xlu0 %517
          %s520 = sor.u32 256, 64
          %521 = vbcast.lane.b32.xlu0 %v487, %s520
          %v522 = vpop.permute.xlu0 %521
          %s524 = sor.u32 256, 72
          %525 = vbcast.lane.b32.xlu0 %v487, %s524
          %v526 = vpop.permute.xlu0 %525
          %s528 = sor.u32 256, 80
          %529 = vbcast.lane.b32.xlu0 %v487, %s528
          %v530 = vpop.permute.xlu0 %529
          %s532 = sor.u32 256, 88
          %533 = vbcast.lane.b32.xlu0 %v487, %s532
          %v534 = vpop.permute.xlu0 %533
          %s536 = sor.u32 256, 96
          %537 = vbcast.lane.b32.xlu0 %v487, %s536
          %v538 = vpop.permute.xlu0 %537
          %s540 = sor.u32 256, 104
          %541 = vbcast.lane.b32.xlu0 %v487, %s540
          %v542 = vpop.permute.xlu0 %541
          %s544 = sor.u32 256, 112
          %545 = vbcast.lane.b32.xlu0 %v487, %s544
          %v546 = vpop.permute.xlu0 %545
          %s548 = sor.u32 256, 120
          %549 = vbcast.lane.b32.xlu0 %v487, %s548
          %v550 = vpop.permute.xlu0 %549
          %vm551 = vcmp.eq.s32.totalorder %v490, %v277
          %vm552 = vcmp.eq.s32.totalorder %v494, %v277
          %vm553 = vcmp.eq.s32.totalorder %v498, %v277
          %vm554 = vcmp.eq.s32.totalorder %v502, %v277
          %vm555 = vcmp.eq.s32.totalorder %v506, %v277
          %vm556 = vcmp.eq.s32.totalorder %v510, %v277
          %vm557 = vcmp.eq.s32.totalorder %v514, %v277
          %vm558 = vcmp.eq.s32.totalorder %v518, %v277
          %vm559 = vcmp.eq.s32.totalorder %v522, %v277
          %vm560 = vcmp.eq.s32.totalorder %v526, %v277
          %vm561 = vcmp.eq.s32.totalorder %v530, %v277
          %vm562 = vcmp.eq.s32.totalorder %v534, %v277
          %vm563 = vcmp.eq.s32.totalorder %v538, %v277
          %vm564 = vcmp.eq.s32.totalorder %v542, %v277
          %vm565 = vcmp.eq.s32.totalorder %v546, %v277
          %vm566 = vcmp.eq.s32.totalorder %v550, %v277
          %v567 = vsel %vm551, 1, 0
          %v568 = vsel %vm552, 1, 0
          %v569 = vsel %vm553, 1, 0
          %v570 = vsel %vm554, 1, 0
          %v571 = vsel %vm555, 1, 0
          %v572 = vsel %vm556, 1, 0
          %v573 = vsel %vm557, 1, 0
          %v574 = vsel %vm558, 1, 0
          %v575 = vsel %vm559, 1, 0
          %v576 = vsel %vm560, 1, 0
          %v577 = vsel %vm561, 1, 0
          %v578 = vsel %vm562, 1, 0
          %v579 = vsel %vm563, 1, 0
          %v580 = vsel %vm564, 1, 0
          %v581 = vsel %vm565, 1, 0
          %v582 = vsel %vm566, 1, 0
          %v583 = vcvt.s32.f32 %v567
          %v584 = vcvt.s32.f32 %v568
          %v585 = vcvt.s32.f32 %v569
          %v586 = vcvt.s32.f32 %v570
          %v587 = vcvt.s32.f32 %v571
          %v588 = vcvt.s32.f32 %v572
          %v589 = vcvt.s32.f32 %v573
          %v590 = vcvt.s32.f32 %v574
          %v591 = vcvt.s32.f32 %v575
          %v592 = vcvt.s32.f32 %v576
          %v593 = vcvt.s32.f32 %v577
          %v594 = vcvt.s32.f32 %v578
          %v595 = vcvt.s32.f32 %v579
          %v596 = vcvt.s32.f32 %v580
          %v597 = vcvt.s32.f32 %v581
          %v598 = vcvt.s32.f32 %v582
          %v599 = vadd.f32 %v583, 0.0
          %v600 = vadd.f32 %v584, 0.0
          %v601 = vadd.f32 %v585, 0.0
          %v602 = vadd.f32 %v586, 0.0
          %v603 = vadd.f32 %v587, 0.0
          %v604 = vadd.f32 %v588, 0.0
          %v605 = vadd.f32 %v589, 0.0
          %v606 = vadd.f32 %v590, 0.0
          %v607 = vadd.f32 %v591, 0.0
          %v608 = vadd.f32 %v592, 0.0
          %v609 = vadd.f32 %v593, 0.0
          %v610 = vadd.f32 %v594, 0.0
          %v611 = vadd.f32 %v595, 0.0
          %v612 = vadd.f32 %v596, 0.0
          %v613 = vadd.f32 %v597, 0.0
          %v614 = vadd.f32 %v598, 0.0
          %v615 = vadd.f32 %v599, %v600
          %v616 = vadd.f32 %v615, %v601
          %v617 = vadd.f32 %v616, %v602
          %v618 = vadd.f32 %v617, %v603
          %v619 = vadd.f32 %v618, %v604
          %v620 = vadd.f32 %v619, %v605
          %v621 = vadd.f32 %v620, %v606
          %v622 = vadd.f32 %v621, %v607
          %v623 = vadd.f32 %v622, %v608
          %v624 = vadd.f32 %v623, %v609
          %v625 = vadd.f32 %v624, %v610
          %v626 = vadd.f32 %v625, %v611
          %v627 = vadd.f32 %v626, %v612
          %v628 = vadd.f32 %v627, %v613
          %v629 = vadd.f32 %v628, %v614
          %v630 = vrot.slane %v629, 4
          %v631 = vadd.f32 %v629, %v630
          %v632 = vrot.slane %v631, 2
          %v633 = vadd.f32 %v631, %v632
          %v634 = vrot.slane %v633, 1
          %v635 = vadd.f32 %v633, %v634
          %v636 = vadd.f32 %v466, %v635
        $region52: #{hist_loss.3} parent=31 // loop_footer
          %s465 = sadd.s32 1, %s461
        $region53: #{hist_loss.3} parent=31 // loop_footer_branch
          %460 = sbr.rel target = $region49
        $region54: #{hist_loss.3} parent=31 // loop_exit
          _
        %v637 = vcvt.f32.s32.to.zero.pseudo %v466
        %v638 = vadd.s32 %v459, %v637
        %639 = vst [vmem:[%s266] sm:$0x1] %v638
        %p640 = scmp.lt.s32.totalorder %s21, 1
        %s641 = scalar_select %p640, %s21, 1
        %s642 = scalar_lea.vmem %s3, %s641
        %p643 = scmp.lt.s32.totalorder %s21, 1
        %s644 = scalar_select %p643, %s21, 1
        %s645 = scalar_lea.vmem %s4, %s644
        // Predicated region
        $region55: #{hist_loss.3} parent=31 // pred_check
          %p646 = pneg %p124
        $region56: #{hist_loss.3} parent=31 // pred_check_branch
          %648 = sbr.rel (%p646) target = $region58
        $region57: #{hist_loss.3} parent=31 // pred_region
          _
        $region58: #{hist_loss.3} parent=31 // pred_fallthru
          _
        // Predicated region
        $region59: #{hist_loss.3} parent=31 // pred_check
          %p649 = pneg %p150
        $region60: #{hist_loss.3} parent=31 // pred_check_branch
          %651 = sbr.rel (%p649) target = $region62
        $region61: #{hist_loss.3} parent=31 // pred_region
          _
        $region62: #{hist_loss.3} parent=31 // pred_fallthru
          _
      $region32: #{hist_loss.3} parent=5 // pred_fallthru
        _
      %p652 = scmp.le.s32.totalorder 2, %s12
      // Predicated region
      $region63: #{hist_loss.3} parent=5 // pred_check
        %p653 = pneg %p652
      $region64: #{hist_loss.3} parent=5 // pred_check_branch
        %655 = sbr.rel (%p653) target = $region66
      $region65: #{hist_loss.3} parent=5 // pred_region
        %s656 = ssub.s32 %s12, 2
        // Predicated region
        $region67: #{hist_loss.3} parent=65 // pred_check
          %p657 = pneg %p130
        $region68: #{hist_loss.3} parent=65 // pred_check_branch
          %659 = sbr.rel (%p657) target = $region70
        $region69: #{hist_loss.3} parent=65 // pred_region
          %p660 = scmp.lt.s32.totalorder %s23, 1
          %s661 = scalar_select %p660, %s23, 1
          %s662 = scalar_lea.vmem %s3, %s661
        $region70: #{hist_loss.3} parent=65 // pred_fallthru
          _
        // Predicated region
        $region71: #{hist_loss.3} parent=65 // pred_check
          %p663 = pneg %p156
        $region72: #{hist_loss.3} parent=65 // pred_check_branch
          %665 = sbr.rel (%p663) target = $region74
        $region73: #{hist_loss.3} parent=65 // pred_region
          %p666 = scmp.lt.s32.totalorder %s23, 1
          %s667 = scalar_select %p666, %s23, 1
          %s668 = scalar_lea.vmem %s4, %s667
        $region74: #{hist_loss.3} parent=65 // pred_fallthru
          _
      $region66: #{hist_loss.3} parent=5 // pred_fallthru
        _
    $region6: #{hist_loss.3} parent=1 // loop_footer
      %s16 = sadd.s32 1, %s12
    $region7: #{hist_loss.3} parent=1 // loop_footer_branch
      %11 = sbr.rel target = $region3
    $region8: #{hist_loss.3} parent=1 // loop_exit
      _
    %669 = vsyncpa [#allocation3], 1
    %s670 = scalar_lea.sflag [#allocation3], 1
    %671 = vsyncpa %s670, 1

</llo_original>
